<compile_context>
chip_gen: v5e
topology: v5e:2x2
jax: 0.10.0
libtpu: 0.0.40
codegen_flags: <defaults>
</compile_context>

<pallas_src>
import jax
import jax.numpy as jnp
from jax import lax
from jax.experimental import pallas as pl
from jax.experimental.pallas import tpu as pltpu

EPS = 1e-5  # matches the PyTorch module


def _layernorm_kernel(x_ref, w_ref, b_ref, o_ref):
    # x_ref: (row_tile, C) tile; w_ref/b_ref: (1, C) broadcast over rows.
    x = x_ref[...].astype(jnp.float32)
    mean = jnp.mean(x, axis=-1, keepdims=True)              # mu
    xc = x - mean
    var = jnp.mean(xc * xc, axis=-1, keepdims=True)         # unbiased=False
    inv = lax.rsqrt(var + EPS)                               # EUP rsqrt
    w = w_ref[...].astype(jnp.float32)
    b = b_ref[...].astype(jnp.float32)
    o_ref[...] = (xc * inv * w + b).astype(o_ref.dtype)


def layernorm_withbias_pallas(x, weight, bias, *, row_tile=4096):
    """LayerNorm over the last dim of x (any leading dims), affine weight+bias."""
    *lead, C = x.shape
    M = 1
    for s in lead:
        M *= s
    x2 = x.reshape(M, C)
    w2 = weight.reshape(1, C)
    b2 = bias.reshape(1, C)

    itemsize = x2.dtype.itemsize
    # Sublane multiple: 8 rows for 32-bit, 16 for bf16/f16 (sublane packing).
    sub = max(8, 8 * (4 // max(1, itemsize)))

    # Chip VMEM capacity (v5e/v6e: 128 MiB, v7x: 64 MiB per TC); safe fallback.
    try:
        vmem_cap = int(pltpu.get_tpu_info().vmem_capacity_bytes)
    except Exception:
        vmem_cap = 64 << 20

    # Clamp row_tile so ~6 live tiles (2x in, 2x out double-buffered + f32
    # temps) stay well inside half of VMEM on every generation.
    max_rows_by_vmem = (vmem_cap // 2) // (6 * C * max(itemsize, 4))
    row_tile = min(row_tile, M, max(sub, max_rows_by_vmem))
    row_tile = max(sub, (row_tile // sub) * sub)

    # No padding: Pallas masks the partial last block's stores.
    grid = (pl.cdiv(M, row_tile),)

    tile_bytes = row_tile * C * itemsize
    f32_tile_bytes = row_tile * C * 4
    vmem_bytes = int(min(
        (vmem_cap * 3) // 4,
        max(4 << 20, 4 * tile_bytes + 2 * f32_tile_bytes + 2 * C * 4 + (1 << 20)),
    ))

    out = pl.pallas_call(
        _layernorm_kernel,
        out_shape=jax.ShapeDtypeStruct((M, C), x.dtype),
        grid_spec=pltpu.PrefetchScalarGridSpec(
            num_scalar_prefetch=0,
            grid=grid,
            in_specs=[
                pl.BlockSpec((row_tile, C), lambda i: (i, 0)),
                pl.BlockSpec((1, C), lambda i: (0, 0)),
                pl.BlockSpec((1, C), lambda i: (0, 0)),
            ],
            out_specs=pl.BlockSpec((row_tile, C), lambda i: (i, 0)),
        ),
        compiler_params=pltpu.CompilerParams(
            dimension_semantics=("parallel",),
            vmem_limit_bytes=vmem_bytes,
        ),
    )(x2, w2, b2)

    return out.reshape(*lead, C)


def layernorm_withbias_ref(x, weight, bias):
    """Pure-JAX reference matching the PyTorch forward exactly."""
    mu = x.mean(-1, keepdims=True)
    var = ((x - mu) ** 2).mean(-1, keepdims=True)            # unbiased=False
    return (x - mu) / jnp.sqrt(var + EPS) * weight + bias


if __name__ == "__main__":
    key = jax.random.PRNGKey(0)
    kx, kw, kb = jax.random.split(key, 3)

    # spa-former applies this to (B, H*W, C) tokens; C=128 keeps lanes dense.
    B, HW, C = 2, 64, 128
    x = jax.random.normal(kx, (B, HW, C), jnp.float32)
    weight = 1.0 + 0.1 * jax.random.normal(kw, (C,), jnp.float32)
    bias = 0.1 * jax.random.normal(kb, (C,), jnp.float32)

    y = layernorm_withbias_pallas(x, weight, bias)
    jax.block_until_ready(y)
    y_ref = layernorm_withbias_ref(x, weight, bias)
    err = float(jnp.max(jnp.abs(y - y_ref)))
    assert jnp.allclose(y, y_ref, rtol=1e-4, atol=1e-4), f"max abs err {err}"

    # Ragged row count -> exercises the masked partial last block
    # (no host-side pad or slice; row_tile=72 gives grid=(2,) with a 2-row tail).
    x3 = jax.random.normal(kx, (2, 37, C), jnp.float32)
    y3 = layernorm_withbias_pallas(x3, weight, bias, row_tile=72)
    jax.block_until_ready(y3)
    y3_ref = layernorm_withbias_ref(x3, weight, bias)
    err3 = float(jnp.max(jnp.abs(y3 - y3_ref)))
    assert jnp.allclose(y3, y3_ref, rtol=1e-4, atol=1e-4), f"max abs err {err3}"

    print("KERNEL_OK")
</pallas_src>

<mosaic_0001>
module attributes {stable_mosaic.version = 11 : i64} {
  func.func @_layernorm_kernel(%arg0: i32, %arg1: memref<128x128xf32, #tpu.memory_space<vmem>>, %arg2: memref<1x128xf32, #tpu.memory_space<vmem>>, %arg3: memref<1x128xf32, #tpu.memory_space<vmem>>, %arg4: memref<128x128xf32, #tpu.memory_space<vmem>>) attributes {dimension_semantics = [#tpu.dimension_semantics<parallel>], iteration_bounds = array<i64: 1>, scalar_prefetch = 0 : i64, scratch_operands = 0 : i64, tpu.core_type = #tpu.core_type<tc>, window_params = [{transform_indices = @transform_0, window_bounds = array<i64: 128, 128>}, {pipeline_mode = #tpu.pipeline_mode<synchronous>, transform_indices = @transform_1, window_bounds = array<i64: 1, 128>}, {pipeline_mode = #tpu.pipeline_mode<synchronous>, transform_indices = @transform_2, window_bounds = array<i64: 1, 128>}, {transform_indices = @transform_3, window_bounds = array<i64: 128, 128>}]} {
    %c0 = arith.constant 0 : index
    %c0_0 = arith.constant 0 : index
    %0 = vector.load %arg1[%c0, %c0_0] : memref<128x128xf32, #tpu.memory_space<vmem>>, vector<128x128xf32>
    %cst = arith.constant dense<0.000000e+00> : vector<128xf32>
    %1 = vector.multi_reduction <add>, %0, %cst [1] : vector<128x128xf32> to vector<128xf32>
    %2 = vector.shape_cast %1 : vector<128xf32> to vector<128x1xf32>
    %cst_1 = arith.constant 1.280000e+02 : f32
    %3 = vector.broadcast %cst_1 : f32 to vector<128x1xf32>
    %4 = arith.divf %2, %3 : vector<128x1xf32>
    %5 = vector.broadcast %4 : vector<128x1xf32> to vector<128x128xf32>
    %6 = arith.subf %0, %5 : vector<128x128xf32>
    %7 = arith.mulf %6, %6 : vector<128x128xf32>
    %cst_2 = arith.constant dense<0.000000e+00> : vector<128xf32>
    %8 = vector.multi_reduction <add>, %7, %cst_2 [1] : vector<128x128xf32> to vector<128xf32>
    %9 = vector.shape_cast %8 : vector<128xf32> to vector<128x1xf32>
    %cst_3 = arith.constant 1.280000e+02 : f32
    %10 = vector.broadcast %cst_3 : f32 to vector<128x1xf32>
    %11 = arith.divf %9, %10 : vector<128x1xf32>
    %cst_4 = arith.constant 9.99999974E-6 : f32
    %12 = vector.broadcast %cst_4 : f32 to vector<128x1xf32>
    %13 = arith.addf %11, %12 : vector<128x1xf32>
    %14 = math.rsqrt %13 : vector<128x1xf32>
    %c0_5 = arith.constant 0 : index
    %c0_6 = arith.constant 0 : index
    %15 = vector.load %arg2[%c0_5, %c0_6] : memref<1x128xf32, #tpu.memory_space<vmem>>, vector<1x128xf32>
    %c0_7 = arith.constant 0 : index
    %c0_8 = arith.constant 0 : index
    %16 = vector.load %arg3[%c0_7, %c0_8] : memref<1x128xf32, #tpu.memory_space<vmem>>, vector<1x128xf32>
    %17 = vector.broadcast %14 : vector<128x1xf32> to vector<128x128xf32>
    %18 = arith.mulf %6, %17 : vector<128x128xf32>
    %19 = vector.broadcast %15 : vector<1x128xf32> to vector<128x128xf32>
    %20 = arith.mulf %18, %19 : vector<128x128xf32>
    %21 = vector.broadcast %16 : vector<1x128xf32> to vector<128x128xf32>
    %22 = arith.addf %20, %21 : vector<128x128xf32>
    %c0_9 = arith.constant 0 : index
    %c0_10 = arith.constant 0 : index
    %23 = vector.load %arg4[%c0_9, %c0_10] : memref<128x128xf32, #tpu.memory_space<vmem>>, vector<128x128xf32>
    tpu.vector_store %arg4[%c0_9, %c0_10], %22 {strides = array<i32>} : memref<128x128xf32, #tpu.memory_space<vmem>>, vector<128x128xf32>,
    return
  }
  func.func @transform_0(%arg0: i32) -> (i32, i32) {
    %c0_i32 = arith.constant 0 : i32
    %c0_i32_0 = arith.constant 0 : i32
    return %arg0, %c0_i32 : i32, i32
  }
  func.func @transform_1(%arg0: i32) -> (i32, i32) {
    %c0_i32 = arith.constant 0 : i32
    %c0_i32_0 = arith.constant 0 : i32
    %c0_i32_1 = arith.constant 0 : i32
    return %c0_i32, %c0_i32_0 : i32, i32
  }
  func.func @transform_2(%arg0: i32) -> (i32, i32) {
    %c0_i32 = arith.constant 0 : i32
    %c0_i32_0 = arith.constant 0 : i32
    %c0_i32_1 = arith.constant 0 : i32
    return %c0_i32, %c0_i32_0 : i32, i32
  }
  func.func @transform_3(%arg0: i32) -> (i32, i32) {
    %c0_i32 = arith.constant 0 : i32
    %c0_i32_0 = arith.constant 0 : i32
    return %arg0, %c0_i32 : i32, i32
  }
}

</mosaic_0001>

<llo_original>
// kernel: tpu_custom_call.1
$region0: #{tpu_custom_call.1}
  #allocation0 [shape = 'u32[]', space=smem, size = 0x4, offset = 0x4, fixed_abs, tag = 'smem constant byte address 0x4 - core index']
  #allocation1 [shape = 'u32[72,128]{1,0:T(1,128)}', space=vmem, size = 0x9000, scoped, tag = 'internal scratch']
  %s0 = inlined_call_operand.hbm [shape: f32[128,128], index: 0, kind: input, shape index: {}]
  %s1 = inlined_call_operand.hbm [shape: f32[1,128], index: 1, kind: input, shape index: {}]
  %s2 = inlined_call_operand.vmem [shape: f32[1,128], index: 2, kind: input, shape index: {}]
  %s3 = inlined_call_operand.hbm [shape: f32[128,128], index: 3, kind: output, shape index: {}]
  %s4 = sld [smem:[#allocation0]]
  $region30: #{tpu_custom_call.1} parent=0
    _
  %s6 = ssub.s32 1, %s4
  %s7 = scalar_select 0, %s6, %s4
  $region1: #{tpu_custom_call.1} parent=0
    #allocation2 [shape = 'u8[65536]{0}', space=vmem, size = 0x10000, scoped, tag = 'input window, operand 0, single buffered']
    #allocation3 [shape = 's32[1]{0}', space=sflag, size = 0x4, scoped, tag = 'scoped memory for tpu_custom_call.1']
    #allocation4 [shape = 's32[1]{0}', space=sflag, size = 0x4, scoped, tag = 'scoped memory for tpu_custom_call.1']
    #allocation5 [shape = 'u8[512]{0}', space=vmem, size = 0x400, scoped, tag = 'input window, operand 1, single buffered']
    #allocation6 [shape = 's32[1]{0}', space=sflag, size = 0x4, scoped, tag = 'scoped memory for tpu_custom_call.1']
    #allocation7 [shape = 'u8[65536]{0}', space=vmem, size = 0x10000, scoped, tag = 'output window, operand 0, single buffered']
    %8 = vsyncpa [#allocation3], 0
    %9 = vsyncpa [#allocation6], 0
    %10 = vsyncpa [#allocation4], 0
    // Predicated region
    $region2: #{tpu_custom_call.1} parent=1 // pred_check
      _
    $region3: #{tpu_custom_call.1} parent=1 // pred_check_branch
      %12 = sbr.rel (0) target = $region5
    $region4: #{tpu_custom_call.1} parent=1 // pred_region
      %14 = vsyncadd [#allocation3], 0
      %s15 = sshll.u32 %s0, 4
      %s16 = int_to_ptr.hbm [resolvable:$true] %s15
      %s17 = sshll.u32 [#allocation2], 4
      %s18 = int_to_ptr.vmem [resolvable:$true] %s17
      %23 = dma.hbm_to_vmem [thread:$0]  %s16, 2048, %s18, [#allocation3], 128, 128, 8
    $region5: #{tpu_custom_call.1} parent=1 // pred_fallthru
      _
    // Predicated region
    $region6: #{tpu_custom_call.1} parent=1 // pred_check
      _
    $region7: #{tpu_custom_call.1} parent=1 // pred_check_branch
      %25 = sbr.rel (0) target = $region9
    $region8: #{tpu_custom_call.1} parent=1 // pred_region
      %27 = vsyncadd [#allocation6], 0
      %s29 = sshll.u32 %s1, 4
      %s30 = int_to_ptr.hbm [resolvable:$true] %s29
      %s31 = sshll.u32 [#allocation5], 4
      %s32 = int_to_ptr.vmem [resolvable:$true] %s31
      %34 = dma.hbm_to_vmem [thread:$0]  %s30, 16, %s32, [#allocation6]
    $region9: #{tpu_custom_call.1} parent=1 // pred_fallthru
      _
    // Predicated region
    $region10: #{tpu_custom_call.1} parent=1 // pred_check
      _
    $region11: #{tpu_custom_call.1} parent=1 // pred_check_branch
      %36 = sbr.rel (0) target = $region13
    $region12: #{tpu_custom_call.1} parent=1 // pred_region
      _
    $region13: #{tpu_custom_call.1} parent=1 // pred_fallthru
      _
    // Predicated region
    $region14: #{tpu_custom_call.1} parent=1 // pred_check
      _
    $region15: #{tpu_custom_call.1} parent=1 // pred_check_branch
      %38 = sbr.rel (0) target = $region17
    $region16: #{tpu_custom_call.1} parent=1 // pred_region
      %40 = dma.done [#allocation3], 2048
    $region17: #{tpu_custom_call.1} parent=1 // pred_fallthru
      _
    // Predicated region
    $region18: #{tpu_custom_call.1} parent=1 // pred_check
      _
    $region19: #{tpu_custom_call.1} parent=1 // pred_check_branch
      %42 = sbr.rel (0) target = $region21
    $region20: #{tpu_custom_call.1} parent=1 // pred_region
      %44 = dma.done [#allocation6], 16
    $region21: #{tpu_custom_call.1} parent=1 // pred_fallthru
      _
    %v45 = vld [vmem:[#allocation2] sm:$0xff]
    %v46 = vld [vmem:[#allocation2 + $0x8] sm:$0xff]
    %v47 = vld [vmem:[#allocation2 + $0x10] sm:$0xff]
    %v48 = vld [vmem:[#allocation2 + $0x18] sm:$0xff]
    %v49 = vld [vmem:[#allocation2 + $0x20] sm:$0xff]
    %v50 = vld [vmem:[#allocation2 + $0x28] sm:$0xff]
    %v51 = vld [vmem:[#allocation2 + $0x30] sm:$0xff]
    %v52 = vld [vmem:[#allocation2 + $0x38] sm:$0xff]
    %v53 = vld [vmem:[#allocation2 + $0x40] sm:$0xff]
    %v54 = vld [vmem:[#allocation2 + $0x48] sm:$0xff]
    %v55 = vld [vmem:[#allocation2 + $0x50] sm:$0xff]
    %v56 = vld [vmem:[#allocation2 + $0x58] sm:$0xff]
    %v57 = vld [vmem:[#allocation2 + $0x60] sm:$0xff]
    %v58 = vld [vmem:[#allocation2 + $0x68] sm:$0xff]
    %v59 = vld [vmem:[#allocation2 + $0x70] sm:$0xff]
    %v60 = vld [vmem:[#allocation2 + $0x78] sm:$0xff]
    %61 = vadd.xlane.f32.xlu0 %v45
    %v62 = vpop.xlane.xlu0 %61
    %63 = vadd.xlane.f32.xlu0 %v46
    %v64 = vpop.xlane.xlu0 %63
    %65 = vadd.xlane.f32.xlu0 %v47
    %v66 = vpop.xlane.xlu0 %65
    %67 = vadd.xlane.f32.xlu0 %v48
    %v68 = vpop.xlane.xlu0 %67
    %69 = vadd.xlane.f32.xlu0 %v49
    %v70 = vpop.xlane.xlu0 %69
    %71 = vadd.xlane.f32.xlu0 %v50
    %v72 = vpop.xlane.xlu0 %71
    %73 = vadd.xlane.f32.xlu0 %v51
    %v74 = vpop.xlane.xlu0 %73
    %75 = vadd.xlane.f32.xlu0 %v52
    %v76 = vpop.xlane.xlu0 %75
    %77 = vadd.xlane.f32.xlu0 %v53
    %v78 = vpop.xlane.xlu0 %77
    %79 = vadd.xlane.f32.xlu0 %v54
    %v80 = vpop.xlane.xlu0 %79
    %81 = vadd.xlane.f32.xlu0 %v55
    %v82 = vpop.xlane.xlu0 %81
    %83 = vadd.xlane.f32.xlu0 %v56
    %v84 = vpop.xlane.xlu0 %83
    %85 = vadd.xlane.f32.xlu0 %v57
    %v86 = vpop.xlane.xlu0 %85
    %87 = vadd.xlane.f32.xlu0 %v58
    %v88 = vpop.xlane.xlu0 %87
    %89 = vadd.xlane.f32.xlu0 %v59
    %v90 = vpop.xlane.xlu0 %89
    %91 = vadd.xlane.f32.xlu0 %v60
    %v92 = vpop.xlane.xlu0 %91
    %v93 = vrcp.pop 128.0
    %v94 = vmul.f32 128.0, %v93
    %v95 = vsub.f32 1.0, %v94
    %v96 = vmul.f32 %v93, %v95
    %v97 = vadd.f32 %v93, %v96
    %vm98 = vweird.f32 %v93
    %v99 = vsel %vm98, %v93, %v97
    %v100 = vmul.f32 %v62, %v99
    %v101 = vmul.f32 %v64, %v99
    %v102 = vmul.f32 %v66, %v99
    %v103 = vmul.f32 %v68, %v99
    %v104 = vmul.f32 %v70, %v99
    %v105 = vmul.f32 %v72, %v99
    %v106 = vmul.f32 %v74, %v99
    %v107 = vmul.f32 %v76, %v99
    %v108 = vmul.f32 %v78, %v99
    %v109 = vmul.f32 %v80, %v99
    %v110 = vmul.f32 %v82, %v99
    %v111 = vmul.f32 %v84, %v99
    %v112 = vmul.f32 %v86, %v99
    %v113 = vmul.f32 %v88, %v99
    %v114 = vmul.f32 %v90, %v99
    %v115 = vmul.f32 %v92, %v99
    %v116 = vsub.f32 %v45, %v100
    %v117 = vsub.f32 %v46, %v101
    %v118 = vsub.f32 %v47, %v102
    %v119 = vsub.f32 %v48, %v103
    %v120 = vsub.f32 %v49, %v104
    %v121 = vsub.f32 %v50, %v105
    %v122 = vsub.f32 %v51, %v106
    %v123 = vsub.f32 %v52, %v107
    %v124 = vsub.f32 %v53, %v108
    %v125 = vsub.f32 %v54, %v109
    %v126 = vsub.f32 %v55, %v110
    %v127 = vsub.f32 %v56, %v111
    %v128 = vsub.f32 %v57, %v112
    %v129 = vsub.f32 %v58, %v113
    %v130 = vsub.f32 %v59, %v114
    %v131 = vsub.f32 %v60, %v115
    %v132 = vmul.f32 %v116, %v116
    %v133 = vmul.f32 %v117, %v117
    %v134 = vmul.f32 %v118, %v118
    %v135 = vmul.f32 %v119, %v119
    %v136 = vmul.f32 %v120, %v120
    %v137 = vmul.f32 %v121, %v121
    %v138 = vmul.f32 %v122, %v122
    %v139 = vmul.f32 %v123, %v123
    %v140 = vmul.f32 %v124, %v124
    %v141 = vmul.f32 %v125, %v125
    %v142 = vmul.f32 %v126, %v126
    %v143 = vmul.f32 %v127, %v127
    %v144 = vmul.f32 %v128, %v128
    %v145 = vmul.f32 %v129, %v129
    %v146 = vmul.f32 %v130, %v130
    %v147 = vmul.f32 %v131, %v131
    %148 = vadd.xlane.f32.xlu0 %v132
    %v149 = vpop.xlane.xlu0 %148
    %150 = vadd.xlane.f32.xlu0 %v133
    %v151 = vpop.xlane.xlu0 %150
    %152 = vadd.xlane.f32.xlu0 %v134
    %v153 = vpop.xlane.xlu0 %152
    %154 = vadd.xlane.f32.xlu0 %v135
    %v155 = vpop.xlane.xlu0 %154
    %156 = vadd.xlane.f32.xlu0 %v136
    %v157 = vpop.xlane.xlu0 %156
    %158 = vadd.xlane.f32.xlu0 %v137
    %v159 = vpop.xlane.xlu0 %158
    %160 = vadd.xlane.f32.xlu0 %v138
    %v161 = vpop.xlane.xlu0 %160
    %162 = vadd.xlane.f32.xlu0 %v139
    %v163 = vpop.xlane.xlu0 %162
    %164 = vadd.xlane.f32.xlu0 %v140
    %v165 = vpop.xlane.xlu0 %164
    %166 = vadd.xlane.f32.xlu0 %v141
    %v167 = vpop.xlane.xlu0 %166
    %168 = vadd.xlane.f32.xlu0 %v142
    %v169 = vpop.xlane.xlu0 %168
    %170 = vadd.xlane.f32.xlu0 %v143
    %v171 = vpop.xlane.xlu0 %170
    %172 = vadd.xlane.f32.xlu0 %v144
    %v173 = vpop.xlane.xlu0 %172
    %174 = vadd.xlane.f32.xlu0 %v145
    %v175 = vpop.xlane.xlu0 %174
    %176 = vadd.xlane.f32.xlu0 %v146
    %v177 = vpop.xlane.xlu0 %176
    %178 = vadd.xlane.f32.xlu0 %v147
    %v179 = vpop.xlane.xlu0 %178
    %v180 = vmul.f32 %v149, %v99
    %v181 = vmul.f32 %v151, %v99
    %v182 = vmul.f32 %v153, %v99
    %v183 = vmul.f32 %v155, %v99
    %v184 = vmul.f32 %v157, %v99
    %v185 = vmul.f32 %v159, %v99
    %v186 = vmul.f32 %v161, %v99
    %v187 = vmul.f32 %v163, %v99
    %v188 = vmul.f32 %v165, %v99
    %v189 = vmul.f32 %v167, %v99
    %v190 = vmul.f32 %v169, %v99
    %v191 = vmul.f32 %v171, %v99
    %v192 = vmul.f32 %v173, %v99
    %v193 = vmul.f32 %v175, %v99
    %v194 = vmul.f32 %v177, %v99
    %v195 = vmul.f32 %v179, %v99
    %v196 = vadd.f32 %v180, 1e-05
    %v197 = vadd.f32 %v181, 1e-05
    %v198 = vadd.f32 %v182, 1e-05
    %v199 = vadd.f32 %v183, 1e-05
    %v200 = vadd.f32 %v184, 1e-05
    %v201 = vadd.f32 %v185, 1e-05
    %v202 = vadd.f32 %v186, 1e-05
    %v203 = vadd.f32 %v187, 1e-05
    %v204 = vadd.f32 %v188, 1e-05
    %v205 = vadd.f32 %v189, 1e-05
    %v206 = vadd.f32 %v190, 1e-05
    %v207 = vadd.f32 %v191, 1e-05
    %v208 = vadd.f32 %v192, 1e-05
    %v209 = vadd.f32 %v193, 1e-05
    %v210 = vadd.f32 %v194, 1e-05
    %v211 = vadd.f32 %v195, 1e-05
    %v212 = vrsqrt.pop %v196
    %v213 = vmul.f32 %v212, %v196
    %v214 = vmul.f32 %v213, %v212
    %v215 = vmul.f32 0.5, %v214
    %v216 = vsub.f32 1.5, %v215
    %v217 = vmul.f32 %v212, %v216
    %vm218 = vweird.f32 %v196
    %vm219 = vweird.f32 %v212
    %vm220 = vmor %vm218, %vm219
    %v221 = vsel %vm220, %v212, %v217
    %v222 = vrsqrt.pop %v197
    %v223 = vmul.f32 %v222, %v197
    %v224 = vmul.f32 %v223, %v222
    %v225 = vmul.f32 0.5, %v224
    %v226 = vsub.f32 1.5, %v225
    %v227 = vmul.f32 %v222, %v226
    %vm228 = vweird.f32 %v197
    %vm229 = vweird.f32 %v222
    %vm230 = vmor %vm228, %vm229
    %v231 = vsel %vm230, %v222, %v227
    %v232 = vrsqrt.pop %v198
    %v233 = vmul.f32 %v232, %v198
    %v234 = vmul.f32 %v233, %v232
    %v235 = vmul.f32 0.5, %v234
    %v236 = vsub.f32 1.5, %v235
    %v237 = vmul.f32 %v232, %v236
    %vm238 = vweird.f32 %v198
    %vm239 = vweird.f32 %v232
    %vm240 = vmor %vm238, %vm239
    %v241 = vsel %vm240, %v232, %v237
    %v242 = vrsqrt.pop %v199
    %v243 = vmul.f32 %v242, %v199
    %v244 = vmul.f32 %v243, %v242
    %v245 = vmul.f32 0.5, %v244
    %v246 = vsub.f32 1.5, %v245
    %v247 = vmul.f32 %v242, %v246
    %vm248 = vweird.f32 %v199
    %vm249 = vweird.f32 %v242
    %vm250 = vmor %vm248, %vm249
    %v251 = vsel %vm250, %v242, %v247
    %v252 = vrsqrt.pop %v200
    %v253 = vmul.f32 %v252, %v200
    %v254 = vmul.f32 %v253, %v252
    %v255 = vmul.f32 0.5, %v254
    %v256 = vsub.f32 1.5, %v255
    %v257 = vmul.f32 %v252, %v256
    %vm258 = vweird.f32 %v200
    %vm259 = vweird.f32 %v252
    %vm260 = vmor %vm258, %vm259
    %v261 = vsel %vm260, %v252, %v257
    %v262 = vrsqrt.pop %v201
    %v263 = vmul.f32 %v262, %v201
    %v264 = vmul.f32 %v263, %v262
    %v265 = vmul.f32 0.5, %v264
    %v266 = vsub.f32 1.5, %v265
    %v267 = vmul.f32 %v262, %v266
    %vm268 = vweird.f32 %v201
    %vm269 = vweird.f32 %v262
    %vm270 = vmor %vm268, %vm269
    %v271 = vsel %vm270, %v262, %v267
    %v272 = vrsqrt.pop %v202
    %v273 = vmul.f32 %v272, %v202
    %v274 = vmul.f32 %v273, %v272
    %v275 = vmul.f32 0.5, %v274
    %v276 = vsub.f32 1.5, %v275
    %v277 = vmul.f32 %v272, %v276
    %vm278 = vweird.f32 %v202
    %vm279 = vweird.f32 %v272
    %vm280 = vmor %vm278, %vm279
    %v281 = vsel %vm280, %v272, %v277
    %v282 = vrsqrt.pop %v203
    %v283 = vmul.f32 %v282, %v203
    %v284 = vmul.f32 %v283, %v282
    %v285 = vmul.f32 0.5, %v284
    %v286 = vsub.f32 1.5, %v285
    %v287 = vmul.f32 %v282, %v286
    %vm288 = vweird.f32 %v203
    %vm289 = vweird.f32 %v282
    %vm290 = vmor %vm288, %vm289
    %v291 = vsel %vm290, %v282, %v287
    %v292 = vrsqrt.pop %v204
    %v293 = vmul.f32 %v292, %v204
    %v294 = vmul.f32 %v293, %v292
    %v295 = vmul.f32 0.5, %v294
    %v296 = vsub.f32 1.5, %v295
    %v297 = vmul.f32 %v292, %v296
    %vm298 = vweird.f32 %v204
    %vm299 = vweird.f32 %v292
    %vm300 = vmor %vm298, %vm299
    %v301 = vsel %vm300, %v292, %v297
    %v302 = vrsqrt.pop %v205
    %v303 = vmul.f32 %v302, %v205
    %v304 = vmul.f32 %v303, %v302
    %v305 = vmul.f32 0.5, %v304
    %v306 = vsub.f32 1.5, %v305
    %v307 = vmul.f32 %v302, %v306
    %vm308 = vweird.f32 %v205
    %vm309 = vweird.f32 %v302
    %vm310 = vmor %vm308, %vm309
    %v311 = vsel %vm310, %v302, %v307
    %v312 = vrsqrt.pop %v206
    %v313 = vmul.f32 %v312, %v206
    %v314 = vmul.f32 %v313, %v312
    %v315 = vmul.f32 0.5, %v314
    %v316 = vsub.f32 1.5, %v315
    %v317 = vmul.f32 %v312, %v316
    %vm318 = vweird.f32 %v206
    %vm319 = vweird.f32 %v312
    %vm320 = vmor %vm318, %vm319
    %v321 = vsel %vm320, %v312, %v317
    %v322 = vrsqrt.pop %v207
    %v323 = vmul.f32 %v322, %v207
    %v324 = vmul.f32 %v323, %v322
    %v325 = vmul.f32 0.5, %v324
    %v326 = vsub.f32 1.5, %v325
    %v327 = vmul.f32 %v322, %v326
    %vm328 = vweird.f32 %v207
    %vm329 = vweird.f32 %v322
    %vm330 = vmor %vm328, %vm329
    %v331 = vsel %vm330, %v322, %v327
    %v332 = vrsqrt.pop %v208
    %v333 = vmul.f32 %v332, %v208
    %v334 = vmul.f32 %v333, %v332
    %v335 = vmul.f32 0.5, %v334
    %v336 = vsub.f32 1.5, %v335
    %v337 = vmul.f32 %v332, %v336
    %vm338 = vweird.f32 %v208
    %vm339 = vweird.f32 %v332
    %vm340 = vmor %vm338, %vm339
    %v341 = vsel %vm340, %v332, %v337
    %v342 = vrsqrt.pop %v209
    %v343 = vmul.f32 %v342, %v209
    %v344 = vmul.f32 %v343, %v342
    %v345 = vmul.f32 0.5, %v344
    %v346 = vsub.f32 1.5, %v345
    %v347 = vmul.f32 %v342, %v346
    %vm348 = vweird.f32 %v209
    %vm349 = vweird.f32 %v342
    %vm350 = vmor %vm348, %vm349
    %v351 = vsel %vm350, %v342, %v347
    %v352 = vrsqrt.pop %v210
    %v353 = vmul.f32 %v352, %v210
    %v354 = vmul.f32 %v353, %v352
    %v355 = vmul.f32 0.5, %v354
    %v356 = vsub.f32 1.5, %v355
    %v357 = vmul.f32 %v352, %v356
    %vm358 = vweird.f32 %v210
    %vm359 = vweird.f32 %v352
    %vm360 = vmor %vm358, %vm359
    %v361 = vsel %vm360, %v352, %v357
    %v362 = vrsqrt.pop %v211
    %v363 = vmul.f32 %v362, %v211
    %v364 = vmul.f32 %v363, %v362
    %v365 = vmul.f32 0.5, %v364
    %v366 = vsub.f32 1.5, %v365
    %v367 = vmul.f32 %v362, %v366
    %vm368 = vweird.f32 %v211
    %vm369 = vweird.f32 %v362
    %vm370 = vmor %vm368, %vm369
    %v371 = vsel %vm370, %v362, %v367
    %v372 = vld [vmem:[#allocation5] sm:$0x1]
    %v373 = vld [vmem:[%s2] sm:$0x1]
    %v374 = vmul.f32 %v116, %v221
    %v375 = vmul.f32 %v117, %v231
    %v376 = vmul.f32 %v118, %v241
    %v377 = vmul.f32 %v119, %v251
    %v378 = vmul.f32 %v120, %v261
    %v379 = vmul.f32 %v121, %v271
    %v380 = vmul.f32 %v122, %v281
    %v381 = vmul.f32 %v123, %v291
    %v382 = vmul.f32 %v124, %v301
    %v383 = vmul.f32 %v125, %v311
    %v384 = vmul.f32 %v126, %v321
    %v385 = vmul.f32 %v127, %v331
    %v386 = vmul.f32 %v128, %v341
    %v387 = vmul.f32 %v129, %v351
    %v388 = vmul.f32 %v130, %v361
    %v389 = vmul.f32 %v131, %v371
    %v391 = vperm.slane %v372, 0
    %v393 = vmul.f32 %v374, %v391
    %v394 = vmul.f32 %v375, %v391
    %v395 = vmul.f32 %v376, %v391
    %v396 = vmul.f32 %v377, %v391
    %v397 = vmul.f32 %v378, %v391
    %v398 = vmul.f32 %v379, %v391
    %v399 = vmul.f32 %v380, %v391
    %v400 = vmul.f32 %v381, %v391
    %v401 = vmul.f32 %v382, %v391
    %v402 = vmul.f32 %v383, %v391
    %v403 = vmul.f32 %v384, %v391
    %v404 = vmul.f32 %v385, %v391
    %v405 = vmul.f32 %v386, %v391
    %v406 = vmul.f32 %v387, %v391
    %v407 = vmul.f32 %v388, %v391
    %v408 = vmul.f32 %v389, %v391
    %v410 = vperm.slane %v373, 0
    %v412 = vadd.f32 %v393, %v410
    %v413 = vadd.f32 %v394, %v410
    %v414 = vadd.f32 %v395, %v410
    %v415 = vadd.f32 %v396, %v410
    %v416 = vadd.f32 %v397, %v410
    %v417 = vadd.f32 %v398, %v410
    %v418 = vadd.f32 %v399, %v410
    %v419 = vadd.f32 %v400, %v410
    %v420 = vadd.f32 %v401, %v410
    %v421 = vadd.f32 %v402, %v410
    %v422 = vadd.f32 %v403, %v410
    %v423 = vadd.f32 %v404, %v410
    %v424 = vadd.f32 %v405, %v410
    %v425 = vadd.f32 %v406, %v410
    %v426 = vadd.f32 %v407, %v410
    %v427 = vadd.f32 %v408, %v410
    %428 = vst [vmem:[#allocation7] sm:$0xff] %v412
    %429 = vst [vmem:[#allocation7 + $0x8] sm:$0xff] %v413
    %430 = vst [vmem:[#allocation7 + $0x10] sm:$0xff] %v414
    %431 = vst [vmem:[#allocation7 + $0x18] sm:$0xff] %v415
    %432 = vst [vmem:[#allocation7 + $0x20] sm:$0xff] %v416
    %433 = vst [vmem:[#allocation7 + $0x28] sm:$0xff] %v417
    %434 = vst [vmem:[#allocation7 + $0x30] sm:$0xff] %v418
    %435 = vst [vmem:[#allocation7 + $0x38] sm:$0xff] %v419
    %436 = vst [vmem:[#allocation7 + $0x40] sm:$0xff] %v420
    %437 = vst [vmem:[#allocation7 + $0x48] sm:$0xff] %v421
    %438 = vst [vmem:[#allocation7 + $0x50] sm:$0xff] %v422
    %439 = vst [vmem:[#allocation7 + $0x58] sm:$0xff] %v423
    %440 = vst [vmem:[#allocation7 + $0x60] sm:$0xff] %v424
    %441 = vst [vmem:[#allocation7 + $0x68] sm:$0xff] %v425
    %442 = vst [vmem:[#allocation7 + $0x70] sm:$0xff] %v426
    %443 = vst [vmem:[#allocation7 + $0x78] sm:$0xff] %v427
    // Predicated region
    $region22: #{tpu_custom_call.1} parent=1 // pred_check
      _
    $region23: #{tpu_custom_call.1} parent=1 // pred_check_branch
      %445 = sbr.rel (0) target = $region25
    $region24: #{tpu_custom_call.1} parent=1 // pred_region
      %447 = vsyncadd [#allocation4], 0
      %s448 = sshll.u32 [#allocation7], 4
      %s449 = int_to_ptr.vmem [resolvable:$true] %s448
      %s450 = sshll.u32 %s3, 4
      %s451 = int_to_ptr.hbm [resolvable:$true] %s450
      %456 = dma.vmem_to_hbm [thread:$0]  %s449, 2048, %s451, [#allocation4], 128, 128, 8
    $region25: #{tpu_custom_call.1} parent=1 // pred_fallthru
      _
    // Predicated region
    $region26: #{tpu_custom_call.1} parent=1 // pred_check
      _
    $region27: #{tpu_custom_call.1} parent=1 // pred_check_branch
      %458 = sbr.rel (0) target = $region29
    $region28: #{tpu_custom_call.1} parent=1 // pred_region
      %460 = dma.done [#allocation4], 2048
    $region29: #{tpu_custom_call.1} parent=1 // pred_fallthru
      _
    %461 = vsyncpa [#allocation3], 1
    %462 = vsyncpa [#allocation6], 1
    %463 = vsyncpa [#allocation4], 1

</llo_original>
